<compile_context>
chip_gen: v5e
topology: v5e:2x2
jax: 0.10.0
libtpu: 0.0.40
codegen_flags: <defaults>
</compile_context>

<pallas_src>
import functools

import jax
import jax.numpy as jnp
from jax import lax
from jax.experimental import pallas as pl
from jax.experimental.pallas import tpu as pltpu


def _leaky_relu(x, slope=0.01):
    return jnp.where(x > 0, x, slope * x)


def _round_up(n, m):
    return ((n + m - 1) // m) * m


def _cdiv(a, b):
    return -(-a // b)


# Packed-parameter layout (single resident (136, 1) f32 slab):
#   rows [  0,  64) : b1
#   rows [ 64,  96) : b2
#   rows [ 96, 128) : w3 (final-layer weights as a column)
#   row   128       : b3
#   rows [129, 136) : zero padding (sublane alignment)
_B1_LO, _B1_HI = 0, 64
_B2_LO, _B2_HI = 64, 96
_W3_LO, _W3_HI = 96, 128
_B3_LO, _B3_HI = 128, 129
_PACK_ROWS = 136


def local_estimator_kernel(x_ref, w1_ref, w2_ref, p_ref, o_ref):
    # x_ref : (tile, in_dim) f32 -- natural row-major layout (no HBM transpose).
    # w1_ref: (64, in_dim) bf16, w2_ref: (32, 64) bf16 (grid-invariant, resident).
    # p_ref : (136, 1) f32 packed biases + final-layer column (resident).
    # o_ref : (1, tile) f32 lane-dense output slab.

    # In-kernel bf16 cast: avoids a standalone HBM cast pass over x.
    x = x_ref[...].astype(w1_ref.dtype)

    # Layer 1: contract over in_dim; the transpose of x is absorbed into the
    # MXU operand feed.  (64, in) . (tile, in)^T -> (64, tile), f32 accumulation.
    h = lax.dot_general(w1_ref[...], x,
                        dimension_numbers=(((1,), (1,)), ((), ())),
                        preferred_element_type=jnp.float32)
    h = _leaky_relu(h + p_ref[_B1_LO:_B1_HI, :])

    # Layer 2: (32, 64) @ (64, tile) -> (32, tile), f32 accumulation.
    h = jnp.dot(w2_ref[...], h.astype(w2_ref.dtype),
                preferred_element_type=jnp.float32)
    h = _leaky_relu(h + p_ref[_B2_LO:_B2_HI, :])

    # Layer 3 (32 -> 1): VPU multiply + sublane (XLU) reduce instead of a
    # 1-column MXU pass.  Lane-dense (1, tile) result.
    out = (jnp.sum(h * p_ref[_W3_LO:_W3_HI, :], axis=0, keepdims=True)
           + p_ref[_B3_LO:_B3_HI, :])
    o_ref[...] = out.astype(o_ref.dtype)


def _pick_tile(n, row_tile, min_steps):
    """Tile sizing: bound padding to <128 rows per grid step and (when N is
    large enough) give the grid >= min_steps steps so v7x megacore sharding
    has work on both TensorCores."""
    steps = max(_cdiv(n, row_tile), 1)
    if steps < min_steps and n >= min_steps * 128:
        steps = min_steps
    tile = _round_up(_cdiv(n, steps), 128)
    steps = _cdiv(n, tile)
    return tile, steps * tile


@functools.partial(jax.jit, static_argnames=("row_tile", "min_steps"))
def local_estimator_forward(x, params, *, row_tile=8192, min_steps=2):
    """x: (N, input_size) float32.  params in PyTorch nn.Linear layout
    (w: (out, in), b: (out,)).  Returns (N, 1) float32."""
    N, in_dim = x.shape
    w1, b1, w2, b2, w3, b3 = params

    tile, n_pad = _pick_tile(N, row_tile, min_steps)
    grid = (n_pad // tile,)

    # All of this fuses into the jit: pad rows (padded rows are computed and
    # sliced away), cast the tiny weight matrices, pack the small params.
    x_p = jnp.pad(x.astype(jnp.float32), ((0, n_pad - N), (0, 0)))
    w1m = w1.astype(jnp.bfloat16)                            # (64, in_dim)
    w2m = w2.astype(jnp.bfloat16)                            # (32, 64)
    pvec = jnp.concatenate([b1.reshape(-1), b2.reshape(-1),
                            w3.reshape(-1), b3.reshape(-1)]).astype(jnp.float32)
    packed = jnp.pad(pvec, (0, _PACK_ROWS - pvec.shape[0])).reshape(_PACK_ROWS, 1)

    out = pl.pallas_call(
        local_estimator_kernel,
        out_shape=jax.ShapeDtypeStruct((1, n_pad), jnp.float32),
        grid_spec=pltpu.PrefetchScalarGridSpec(
            num_scalar_prefetch=0,
            grid=grid,
            in_specs=[
                pl.BlockSpec((tile, in_dim), lambda i: (i, 0)),   # x (streamed)
                pl.BlockSpec(w1m.shape, lambda i: (0, 0)),        # W1 (resident)
                pl.BlockSpec(w2m.shape, lambda i: (0, 0)),        # W2 (resident)
                pl.BlockSpec(packed.shape, lambda i: (0, 0)),     # packed b1/b2/w3/b3
            ],
            out_specs=pl.BlockSpec((1, tile), lambda i: (0, i)),  # lane-dense out
        ),
        compiler_params=pltpu.CompilerParams(
            dimension_semantics=("parallel",)),   # shards steps across v7x's 2 TCs
    )(x_p, w1m, w2m, packed)

    return out[0, :N].reshape(N, 1)


def init_params(key, input_size):
    """PyTorch nn.Linear default init (uniform +/- 1/sqrt(fan_in)),
    weights in native (out_features, in_features) layout."""
    ks = jax.random.split(key, 6)

    def lin(kw, kb, fan_in, fan_out):
        bound = 1.0 / jnp.sqrt(fan_in)
        w = jax.random.uniform(kw, (fan_out, fan_in), jnp.float32, -bound, bound)
        b = jax.random.uniform(kb, (fan_out,), jnp.float32, -bound, bound)
        return w, b

    w1, b1 = lin(ks[0], ks[1], input_size, 64)
    w2, b2 = lin(ks[2], ks[3], 64, 32)
    w3, b3 = lin(ks[4], ks[5], 32, 1)
    return (w1, b1, w2, b2, w3, b3)


def reference_forward(x, params):
    w1, b1, w2, b2, w3, b3 = params
    mm = functools.partial(jnp.matmul, precision=jax.lax.Precision.HIGHEST)
    h = _leaky_relu(mm(x, w1.T) + b1)
    h = _leaky_relu(mm(h, w2.T) + b2)
    return mm(h, w3.T) + b3


if __name__ == "__main__":
    key = jax.random.PRNGKey(0)
    k_x, k_p = jax.random.split(key)

    N = 1000          # ragged packed-sequence length (exercises padding + 2-step grid)
    input_size = 32   # LocalEstimator input_size

    x = jax.random.normal(k_x, (N, input_size), jnp.float32)
    params = init_params(k_p, input_size)

    ref = reference_forward(x, params)

    # Default config: padding-bounded tile, >=2-step parallel grid.
    out = jax.block_until_ready(local_estimator_forward(x, params))
    assert out.shape == (N, 1)
    assert jnp.allclose(out, ref, atol=5e-2, rtol=5e-2), "mismatch vs reference"

    # Multi-step grid path (row_tile=256 -> 4 grid steps) for coverage.
    out2 = jax.block_until_ready(local_estimator_forward(x, params, row_tile=256))
    assert jnp.allclose(out2, ref, atol=5e-2, rtol=5e-2), "mismatch vs reference (tiled)"

    # TODO(synk): eval_on_batch (pack_padded_sequence + masked MAPE loss) is a
    # training-side utility, not part of forward; not implemented as a kernel.
    print("KERNEL_OK")
</pallas_src>

<mosaic_0001>
module attributes {stable_mosaic.version = 11 : i64} {
  func.func @local_estimator_kernel(%arg0: i32, %arg1: memref<512x32xf32, #tpu.memory_space<vmem>>, %arg2: memref<64x32xbf16, #tpu.memory_space<vmem>>, %arg3: memref<32x64xbf16, #tpu.memory_space<vmem>>, %arg4: memref<136x1xf32, #tpu.memory_space<vmem>>, %arg5: memref<1x512xf32, #tpu.memory_space<vmem>>) attributes {dimension_semantics = [#tpu.dimension_semantics<parallel>], iteration_bounds = array<i64: 2>, scalar_prefetch = 0 : i64, scratch_operands = 0 : i64, tpu.core_type = #tpu.core_type<tc>, window_params = [{transform_indices = @transform_0, window_bounds = array<i64: 512, 32>}, {pipeline_mode = #tpu.pipeline_mode<synchronous>, transform_indices = @transform_1, window_bounds = array<i64: 64, 32>}, {pipeline_mode = #tpu.pipeline_mode<synchronous>, transform_indices = @transform_2, window_bounds = array<i64: 32, 64>}, {pipeline_mode = #tpu.pipeline_mode<synchronous>, transform_indices = @transform_3, window_bounds = array<i64: 136, 1>}, {transform_indices = @transform_4, window_bounds = array<i64: 1, 512>}]} {
    %c0 = arith.constant 0 : index
    %c0_0 = arith.constant 0 : index
    %0 = vector.load %arg1[%c0, %c0_0] : memref<512x32xf32, #tpu.memory_space<vmem>>, vector<512x32xf32>
    %1 = arith.truncf %0 : vector<512x32xf32> to vector<512x32xbf16>
    %c0_1 = arith.constant 0 : index
    %c0_2 = arith.constant 0 : index
    %2 = vector.load %arg2[%c0_1, %c0_2] : memref<64x32xbf16, #tpu.memory_space<vmem>>, vector<64x32xbf16>
    %cst = arith.constant dense<0.000000e+00> : vector<64x512xf32>
    %3 = tpu.matmul %2, %1, %cst {dimension_numbers = #tpu.dot_dimension_numbers<[1], [1], [0], [0], [0, 0, 1, 0], [], []>} : vector<64x32xbf16>, vector<512x32xbf16>, vector<64x512xf32> -> vector<64x512xf32>
    %c0_3 = arith.constant 0 : index
    %c0_4 = arith.constant 0 : index
    %4 = vector.load %arg4[%c0_3, %c0_4] : memref<136x1xf32, #tpu.memory_space<vmem>>, vector<64x1xf32>
    %5 = vector.broadcast %4 : vector<64x1xf32> to vector<64x512xf32>
    %6 = arith.addf %3, %5 : vector<64x512xf32>
    %cst_5 = arith.constant 0.000000e+00 : f32
    %7 = vector.broadcast %cst_5 : f32 to vector<64x512xf32>
    %8 = arith.cmpf ogt, %6, %7 : vector<64x512xf32>
    %cst_6 = arith.constant 0.00999999977 : f32
    %9 = vector.broadcast %cst_6 : f32 to vector<64x512xf32>
    %10 = arith.mulf %9, %6 : vector<64x512xf32>
    %11 = arith.select %8, %6, %10 : vector<64x512xi1>, vector<64x512xf32>
    %c0_7 = arith.constant 0 : index
    %c0_8 = arith.constant 0 : index
    %12 = vector.load %arg3[%c0_7, %c0_8] : memref<32x64xbf16, #tpu.memory_space<vmem>>, vector<32x64xbf16>
    %13 = arith.truncf %11 : vector<64x512xf32> to vector<64x512xbf16>
    %cst_9 = arith.constant dense<0.000000e+00> : vector<32x512xf32>
    %14 = tpu.matmul %12, %13, %cst_9 {dimension_numbers = #tpu.dot_dimension_numbers<[1], [0], [0], [1], [0, 0, 1, 1], [], []>} : vector<32x64xbf16>, vector<64x512xbf16>, vector<32x512xf32> -> vector<32x512xf32>
    %c64 = arith.constant 64 : index
    %c0_10 = arith.constant 0 : index
    %15 = vector.load %arg4[%c64, %c0_10] : memref<136x1xf32, #tpu.memory_space<vmem>>, vector<32x1xf32>
    %16 = vector.broadcast %15 : vector<32x1xf32> to vector<32x512xf32>
    %17 = arith.addf %14, %16 : vector<32x512xf32>
    %cst_11 = arith.constant 0.000000e+00 : f32
    %18 = vector.broadcast %cst_11 : f32 to vector<32x512xf32>
    %19 = arith.cmpf ogt, %17, %18 : vector<32x512xf32>
    %cst_12 = arith.constant 0.00999999977 : f32
    %20 = vector.broadcast %cst_12 : f32 to vector<32x512xf32>
    %21 = arith.mulf %20, %17 : vector<32x512xf32>
    %22 = arith.select %19, %17, %21 : vector<32x512xi1>, vector<32x512xf32>
    %c96 = arith.constant 96 : index
    %c0_13 = arith.constant 0 : index
    %23 = vector.load %arg4[%c96, %c0_13] : memref<136x1xf32, #tpu.memory_space<vmem>>, vector<32x1xf32>
    %24 = vector.broadcast %23 : vector<32x1xf32> to vector<32x512xf32>
    %25 = arith.mulf %22, %24 : vector<32x512xf32>
    %cst_14 = arith.constant dense<0.000000e+00> : vector<512xf32>
    %26 = vector.multi_reduction <add>, %25, %cst_14 [0] : vector<32x512xf32> to vector<512xf32>
    %27 = vector.shape_cast %26 : vector<512xf32> to vector<1x512xf32>
    %c128 = arith.constant 128 : index
    %c0_15 = arith.constant 0 : index
    %28 = vector.load %arg4[%c128, %c0_15] : memref<136x1xf32, #tpu.memory_space<vmem>>, vector<1x1xf32>
    %29 = vector.broadcast %28 : vector<1x1xf32> to vector<1x512xf32>
    %30 = arith.addf %27, %29 : vector<1x512xf32>
    %c0_16 = arith.constant 0 : index
    %c0_17 = arith.constant 0 : index
    %31 = vector.load %arg5[%c0_16, %c0_17] : memref<1x512xf32, #tpu.memory_space<vmem>>, vector<1x512xf32>
    tpu.vector_store %arg5[%c0_16, %c0_17], %30 {strides = array<i32>} : memref<1x512xf32, #tpu.memory_space<vmem>>, vector<1x512xf32>,
    return
  }
  func.func @transform_0(%arg0: i32) -> (i32, i32) {
    %c0_i32 = arith.constant 0 : i32
    %c0_i32_0 = arith.constant 0 : i32
    return %arg0, %c0_i32 : i32, i32
  }
  func.func @transform_1(%arg0: i32) -> (i32, i32) {
    %c0_i32 = arith.constant 0 : i32
    %c0_i32_0 = arith.constant 0 : i32
    %c0_i32_1 = arith.constant 0 : i32
    return %c0_i32, %c0_i32_0 : i32, i32
  }
  func.func @transform_2(%arg0: i32) -> (i32, i32) {
    %c0_i32 = arith.constant 0 : i32
    %c0_i32_0 = arith.constant 0 : i32
    %c0_i32_1 = arith.constant 0 : i32
    return %c0_i32, %c0_i32_0 : i32, i32
  }
  func.func @transform_3(%arg0: i32) -> (i32, i32) {
    %c0_i32 = arith.constant 0 : i32
    %c0_i32_0 = arith.constant 0 : i32
    %c0_i32_1 = arith.constant 0 : i32
    return %c0_i32, %c0_i32_0 : i32, i32
  }
  func.func @transform_4(%arg0: i32) -> (i32, i32) {
    %c0_i32 = arith.constant 0 : i32
    %c0_i32_0 = arith.constant 0 : i32
    return %c0_i32, %arg0 : i32, i32
  }
}

</mosaic_0001>

<llo_original>
// kernel: local_estimator_forward.1
$region0: #{local_estimator_forward.1}
  #allocation0 [shape = 'u32[]', space=smem, size = 0x4, offset = 0x4, fixed_abs, tag = 'smem constant byte address 0x4 - core index']
  #allocation1 [shape = 'u32[72,128]{1,0:T(1,128)}', space=vmem, size = 0x9000, scoped, tag = 'internal scratch']
  %s0 = inlined_call_operand.vmem [shape: f32[1024,32], index: 0, kind: input, shape index: {}]
  %s1 = inlined_call_operand.vmem [shape: bf16[64,32], index: 1, kind: input, shape index: {}]
  %s2 = inlined_call_operand.vmem [shape: bf16[32,64], index: 2, kind: input, shape index: {}]
  %s3 = inlined_call_operand.vmem [shape: f32[136,1], index: 3, kind: input, shape index: {}]
  %s4 = inlined_call_operand.vmem [shape: f32[1,1024], index: 4, kind: output, shape index: {}]
  %s5 = sld [smem:[#allocation0]]
  $region49: #{local_estimator_forward.1} parent=0
    _
  %s7 = ssub.s32 1, %s5
  %s8 = scalar_select 0, %s7, %s5
  loop: start=0, step=1, limit=4
  $region2: #{local_estimator_forward.1} parent=0 // loop_pre_header
    _
  $region3: #{local_estimator_forward.1} parent=0 // loop_header
    %s10 = sphi 0, %s14
    %p11 = scmp.ge.s32.totalorder %s10, 4
    %s20 = sphi 0, %s22
    %s23 = sphi 0, %s20
    %s24 = sphi 0, %s23
    %s40 = sphi 0, %s24
    %s44 = sphi 0, %s44
    %s46 = sphi 0, %s44
    %s47 = sphi 0, %s46
    %s61 = sphi 0, %s47
    %s65 = sphi 0, %s65
    %s67 = sphi 0, %s65
    %s68 = sphi 0, %s67
    %s82 = sphi 0, %s68
    %s86 = sphi 0, %s86
    %s88 = sphi 0, %s86
    %s89 = sphi 0, %s88
    %s103 = sphi 0, %s89
    %s109 = sphi 0, %s111
    %s112 = sphi 0, %s109
    %s113 = sphi 0, %s112
    %s129 = sphi 0, %s113
  $region4: #{local_estimator_forward.1} parent=0 // loop_header_branch
    %13 = sbr.rel (%p11) target = $region8
  $region5: #{local_estimator_forward.1} parent=0 // loop_body
    %s15 = ssub.s32 %s10, 1
    %s16 = ssub.s32 %s10, 2
    %s17 = sadd.s32 %s10, 1
    %s18 = ssub.s32 %s10, %s17
    %p19 = scmp.eq.s32.totalorder %s18, 0
    %s21 = sadd.s32 %s20, 1
    %s22 = scalar_select %p19, %s20, %s21
    %p25 = pneg %p19
    %p26 = scmp.eq.s32.totalorder %s10, 1
    %p27 = por %p25, %p26
    %p28 = scmp.ne.s32.totalorder %s20, %s23
    %p29 = scmp.eq.s32.totalorder %s10, 0
    %p30 = por %p28, %p29
    %p31 = scmp.ne.s32.totalorder %s20, %s23
    %p32 = scmp.eq.s32.totalorder %s15, 1
    %p33 = por %p31, %p32
    %p34 = scmp.ne.s32.totalorder %s23, %s24
    %p35 = scmp.eq.s32.totalorder %s15, 0
    %p36 = por %p34, %p35
    %p37 = scmp.ne.s32.totalorder %s23, %s24
    %p38 = scmp.eq.s32.totalorder %s16, 1
    %p39 = por %p37, %p38
    %p41 = scmp.ne.s32.totalorder %s24, %s40
    %p42 = scmp.eq.s32.totalorder %s16, 0
    %p43 = por %p41, %p42
    %s45 = sadd.s32 %s44, 1
    %p48 = scmp.eq.s32.totalorder %s10, 1
    %p49 = scmp.ne.s32.totalorder %s44, %s46
    %p50 = scmp.eq.s32.totalorder %s10, 0
    %p51 = por %p49, %p50
    %p52 = scmp.ne.s32.totalorder %s44, %s46
    %p53 = scmp.eq.s32.totalorder %s15, 1
    %p54 = por %p52, %p53
    %p55 = scmp.ne.s32.totalorder %s46, %s47
    %p56 = scmp.eq.s32.totalorder %s15, 0
    %p57 = por %p55, %p56
    %p58 = scmp.ne.s32.totalorder %s46, %s47
    %p59 = scmp.eq.s32.totalorder %s16, 1
    %p60 = por %p58, %p59
    %p62 = scmp.ne.s32.totalorder %s47, %s61
    %p63 = scmp.eq.s32.totalorder %s16, 0
    %p64 = por %p62, %p63
    %s66 = sadd.s32 %s65, 1
    %p69 = scmp.eq.s32.totalorder %s10, 1
    %p70 = scmp.ne.s32.totalorder %s65, %s67
    %p71 = scmp.eq.s32.totalorder %s10, 0
    %p72 = por %p70, %p71
    %p73 = scmp.ne.s32.totalorder %s65, %s67
    %p74 = scmp.eq.s32.totalorder %s15, 1
    %p75 = por %p73, %p74
    %p76 = scmp.ne.s32.totalorder %s67, %s68
    %p77 = scmp.eq.s32.totalorder %s15, 0
    %p78 = por %p76, %p77
    %p79 = scmp.ne.s32.totalorder %s67, %s68
    %p80 = scmp.eq.s32.totalorder %s16, 1
    %p81 = por %p79, %p80
    %p83 = scmp.ne.s32.totalorder %s68, %s82
    %p84 = scmp.eq.s32.totalorder %s16, 0
    %p85 = por %p83, %p84
    %s87 = sadd.s32 %s86, 1
    %p90 = scmp.eq.s32.totalorder %s10, 1
    %p91 = scmp.ne.s32.totalorder %s86, %s88
    %p92 = scmp.eq.s32.totalorder %s10, 0
    %p93 = por %p91, %p92
    %p94 = scmp.ne.s32.totalorder %s86, %s88
    %p95 = scmp.eq.s32.totalorder %s15, 1
    %p96 = por %p94, %p95
    %p97 = scmp.ne.s32.totalorder %s88, %s89
    %p98 = scmp.eq.s32.totalorder %s15, 0
    %p99 = por %p97, %p98
    %p100 = scmp.ne.s32.totalorder %s88, %s89
    %p101 = scmp.eq.s32.totalorder %s16, 1
    %p102 = por %p100, %p101
    %p104 = scmp.ne.s32.totalorder %s89, %s103
    %p105 = scmp.eq.s32.totalorder %s16, 0
    %p106 = por %p104, %p105
    %s107 = ssub.s32 %s10, %s17
    %p108 = scmp.eq.s32.totalorder %s107, 0
    %s110 = sadd.s32 %s109, 1
    %s111 = scalar_select %p108, %s109, %s110
    %p114 = pneg %p108
    %p115 = scmp.eq.s32.totalorder %s10, 1
    %p116 = por %p114, %p115
    %p117 = scmp.ne.s32.totalorder %s109, %s112
    %p118 = scmp.eq.s32.totalorder %s10, 0
    %p119 = por %p117, %p118
    %p120 = scmp.ne.s32.totalorder %s109, %s112
    %p121 = scmp.eq.s32.totalorder %s15, 1
    %p122 = por %p120, %p121
    %p123 = scmp.ne.s32.totalorder %s112, %s113
    %p124 = scmp.eq.s32.totalorder %s15, 0
    %p125 = por %p123, %p124
    %p126 = scmp.ne.s32.totalorder %s112, %s113
    %p127 = scmp.eq.s32.totalorder %s16, 1
    %p128 = por %p126, %p127
    %p130 = scmp.ne.s32.totalorder %s113, %s129
    %p131 = scmp.eq.s32.totalorder %s16, 0
    %p132 = por %p130, %p131
    %p133 = scmp.le.s32.totalorder 1, %s10
    %p134 = scmp.lt.s32.totalorder %s10, 3
    %p135 = pnand %p133, %p134
    %p136 = pneg %p135
    // Predicated region
    $region9: #{local_estimator_forward.1} parent=5 // pred_check
      _
    $region10: #{local_estimator_forward.1} parent=5 // pred_check_branch
      %138 = sbr.rel (%p135) target = $region12
    $region11: #{local_estimator_forward.1} parent=5 // pred_region
      %s139 = ssub.s32 %s10, 1
      // Predicated region
      $region13: #{local_estimator_forward.1} parent=11 // pred_check
        %p140 = pneg %p57
      $region14: #{local_estimator_forward.1} parent=11 // pred_check_branch
        %142 = sbr.rel (%p140) target = $region16
      $region15: #{local_estimator_forward.1} parent=11 // pred_region
        _
      $region16: #{local_estimator_forward.1} parent=11 // pred_fallthru
        _
      // Predicated region
      $region17: #{local_estimator_forward.1} parent=11 // pred_check
        %p143 = pneg %p78
      $region18: #{local_estimator_forward.1} parent=11 // pred_check_branch
        %145 = sbr.rel (%p143) target = $region20
      $region19: #{local_estimator_forward.1} parent=11 // pred_region
        _
      $region20: #{local_estimator_forward.1} parent=11 // pred_fallthru
        _
      // Predicated region
      $region21: #{local_estimator_forward.1} parent=11 // pred_check
        %p146 = pneg %p99
      $region22: #{local_estimator_forward.1} parent=11 // pred_check_branch
        %148 = sbr.rel (%p146) target = $region24
      $region23: #{local_estimator_forward.1} parent=11 // pred_region
        _
      $region24: #{local_estimator_forward.1} parent=11 // pred_fallthru
        _
    $region12: #{local_estimator_forward.1} parent=5 // pred_fallthru
      _
    %p149 = scmp.lt.s32.totalorder %s10, 2
    // Predicated region
    $region25: #{local_estimator_forward.1} parent=5 // pred_check
      %p150 = pneg %p149
    $region26: #{local_estimator_forward.1} parent=5 // pred_check_branch
      %152 = sbr.rel (%p150) target = $region28
    $region27: #{local_estimator_forward.1} parent=5 // pred_region
      // Predicated region
      $region29: #{local_estimator_forward.1} parent=27 // pred_check
        %p153 = pneg %p30
      $region30: #{local_estimator_forward.1} parent=27 // pred_check_branch
        %155 = sbr.rel (%p153) target = $region32
      $region31: #{local_estimator_forward.1} parent=27 // pred_region
        %s156 = smul.u32 64, %s10
        %p157 = scmp.lt.s32.totalorder %s156, 127
        %s158 = scalar_select %p157, %s156, 127
        %s159 = smul.addr %s158, 8
        %s160 = scalar_lea.vmem %s0, %s159
        %s161 = smul.u32 64, %s10
      $region32: #{local_estimator_forward.1} parent=27 // pred_fallthru
        _
    $region28: #{local_estimator_forward.1} parent=5 // pred_fallthru
      _
    %p162 = scmp.le.s32.totalorder 1, %s10
    %p163 = scmp.lt.s32.totalorder %s10, 3
    %p164 = pnand %p162, %p163
    %p165 = pneg %p164
    // Predicated region
    $region33: #{local_estimator_forward.1} parent=5 // pred_check
      _
    $region34: #{local_estimator_forward.1} parent=5 // pred_check_branch
      %167 = sbr.rel (%p164) target = $region36
    $region35: #{local_estimator_forward.1} parent=5 // pred_region
      %s168 = ssub.s32 %s10, 1
      %s169 = smul.u32 64, %s15
      %p170 = scmp.lt.s32.totalorder %s169, 127
      %s171 = scalar_select %p170, %s169, 127
      %s172 = smul.addr %s171, 8
      %s173 = scalar_lea.vmem %s0, %s172
      %p174 = pneg %p36
      %p175 = pneg %p33
      %p176 = pneg %p57
      %p177 = pneg %p54
      %p178 = pneg %p78
      %p179 = pneg %p75
      %p180 = pneg %p99
      %p181 = pneg %p96
      %p182 = pneg %p125
      %p183 = pneg %p122
      %s184 = smul.u32 4, %s15
      %p185 = scmp.lt.s32.totalorder %s184, 7
      %s186 = scalar_select %p185, %s184, 7
      %s187 = scalar_lea.vmem %s4, %s186
      %s188 = smul.u32 64, %s15
      %p189 = scmp.lt.s32.totalorder %s188, 127
      %s190 = scalar_select %p189, %s188, 127
      %s191 = smul.addr %s190, 8
      %s192 = scalar_lea.vmem %s0, %s191
      %s193 = smul.u32 64, %s15
      %s194 = smul.u32 4, %s15
      %p195 = scmp.lt.s32.totalorder %s194, 7
      %s196 = scalar_select %p195, %s194, 7
      %s197 = scalar_lea.vmem %s4, %s196
      %s198 = smul.u32 4, %s15
      %v200 = vld [vmem:[%s192] sm:$0xff]
      %v201 = vld [vmem:[%s192 + $0x8] sm:$0xff]
      %v202 = vld [vmem:[%s192 + $0x10] sm:$0xff]
      %v203 = vld [vmem:[%s192 + $0x18] sm:$0xff]
      %v204 = vld [vmem:[%s192 + $0x20] sm:$0xff]
      %v205 = vld [vmem:[%s192 + $0x28] sm:$0xff]
      %v206 = vld [vmem:[%s192 + $0x30] sm:$0xff]
      %v207 = vld [vmem:[%s192 + $0x38] sm:$0xff]
      %v208 = vld [vmem:[%s192 + $0x40] sm:$0xff]
      %v209 = vld [vmem:[%s192 + $0x48] sm:$0xff]
      %v210 = vld [vmem:[%s192 + $0x50] sm:$0xff]
      %v211 = vld [vmem:[%s192 + $0x58] sm:$0xff]
      %v212 = vld [vmem:[%s192 + $0x60] sm:$0xff]
      %v213 = vld [vmem:[%s192 + $0x68] sm:$0xff]
      %v214 = vld [vmem:[%s192 + $0x70] sm:$0xff]
      %v215 = vld [vmem:[%s192 + $0x78] sm:$0xff]
      %v216 = vld [vmem:[%s192 + $0x80] sm:$0xff]
      %v217 = vld [vmem:[%s192 + $0x88] sm:$0xff]
      %v218 = vld [vmem:[%s192 + $0x90] sm:$0xff]
      %v219 = vld [vmem:[%s192 + $0x98] sm:$0xff]
      %v220 = vld [vmem:[%s192 + $0xa0] sm:$0xff]
      %v221 = vld [vmem:[%s192 + $0xa8] sm:$0xff]
      %v222 = vld [vmem:[%s192 + $0xb0] sm:$0xff]
      %v223 = vld [vmem:[%s192 + $0xb8] sm:$0xff]
      %v224 = vld [vmem:[%s192 + $0xc0] sm:$0xff]
      %v225 = vld [vmem:[%s192 + $0xc8] sm:$0xff]
      %v226 = vld [vmem:[%s192 + $0xd0] sm:$0xff]
      %v227 = vld [vmem:[%s192 + $0xd8] sm:$0xff]
      %v228 = vld [vmem:[%s192 + $0xe0] sm:$0xff]
      %v229 = vld [vmem:[%s192 + $0xe8] sm:$0xff]
      %v230 = vld [vmem:[%s192 + $0xf0] sm:$0xff]
      %v231 = vld [vmem:[%s192 + $0xf8] sm:$0xff]
      %v232 = vld [vmem:[%s192 + $0x100] sm:$0xff]
      %v233 = vld [vmem:[%s192 + $0x108] sm:$0xff]
      %v234 = vld [vmem:[%s192 + $0x110] sm:$0xff]
      %v235 = vld [vmem:[%s192 + $0x118] sm:$0xff]
      %v236 = vld [vmem:[%s192 + $0x120] sm:$0xff]
      %v237 = vld [vmem:[%s192 + $0x128] sm:$0xff]
      %v238 = vld [vmem:[%s192 + $0x130] sm:$0xff]
      %v239 = vld [vmem:[%s192 + $0x138] sm:$0xff]
      %v240 = vld [vmem:[%s192 + $0x140] sm:$0xff]
      %v241 = vld [vmem:[%s192 + $0x148] sm:$0xff]
      %v242 = vld [vmem:[%s192 + $0x150] sm:$0xff]
      %v243 = vld [vmem:[%s192 + $0x158] sm:$0xff]
      %v244 = vld [vmem:[%s192 + $0x160] sm:$0xff]
      %v245 = vld [vmem:[%s192 + $0x168] sm:$0xff]
      %v246 = vld [vmem:[%s192 + $0x170] sm:$0xff]
      %v247 = vld [vmem:[%s192 + $0x178] sm:$0xff]
      %v248 = vld [vmem:[%s192 + $0x180] sm:$0xff]
      %v249 = vld [vmem:[%s192 + $0x188] sm:$0xff]
      %v250 = vld [vmem:[%s192 + $0x190] sm:$0xff]
      %v251 = vld [vmem:[%s192 + $0x198] sm:$0xff]
      %v252 = vld [vmem:[%s192 + $0x1a0] sm:$0xff]
      %v253 = vld [vmem:[%s192 + $0x1a8] sm:$0xff]
      %v254 = vld [vmem:[%s192 + $0x1b0] sm:$0xff]
      %v255 = vld [vmem:[%s192 + $0x1b8] sm:$0xff]
      %v256 = vld [vmem:[%s192 + $0x1c0] sm:$0xff]
      %v257 = vld [vmem:[%s192 + $0x1c8] sm:$0xff]
      %v258 = vld [vmem:[%s192 + $0x1d0] sm:$0xff]
      %v259 = vld [vmem:[%s192 + $0x1d8] sm:$0xff]
      %v260 = vld [vmem:[%s192 + $0x1e0] sm:$0xff]
      %v261 = vld [vmem:[%s192 + $0x1e8] sm:$0xff]
      %v262 = vld [vmem:[%s192 + $0x1f0] sm:$0xff]
      %v263 = vld [vmem:[%s192 + $0x1f8] sm:$0xff]
      %v264 = vpack.c.bf16 %v201, %v200
      %v265 = vpack.c.bf16 %v203, %v202
      %v266 = vpack.c.bf16 %v205, %v204
      %v267 = vpack.c.bf16 %v207, %v206
      %v268 = vpack.c.bf16 %v209, %v208
      %v269 = vpack.c.bf16 %v211, %v210
      %v270 = vpack.c.bf16 %v213, %v212
      %v271 = vpack.c.bf16 %v215, %v214
      %v272 = vpack.c.bf16 %v217, %v216
      %v273 = vpack.c.bf16 %v219, %v218
      %v274 = vpack.c.bf16 %v221, %v220
      %v275 = vpack.c.bf16 %v223, %v222
      %v276 = vpack.c.bf16 %v225, %v224
      %v277 = vpack.c.bf16 %v227, %v226
      %v278 = vpack.c.bf16 %v229, %v228
      %v279 = vpack.c.bf16 %v231, %v230
      %v280 = vpack.c.bf16 %v233, %v232
      %v281 = vpack.c.bf16 %v235, %v234
      %v282 = vpack.c.bf16 %v237, %v236
      %v283 = vpack.c.bf16 %v239, %v238
      %v284 = vpack.c.bf16 %v241, %v240
      %v285 = vpack.c.bf16 %v243, %v242
      %v286 = vpack.c.bf16 %v245, %v244
      %v287 = vpack.c.bf16 %v247, %v246
      %v288 = vpack.c.bf16 %v249, %v248
      %v289 = vpack.c.bf16 %v251, %v250
      %v290 = vpack.c.bf16 %v253, %v252
      %v291 = vpack.c.bf16 %v255, %v254
      %v292 = vpack.c.bf16 %v257, %v256
      %v293 = vpack.c.bf16 %v259, %v258
      %v294 = vpack.c.bf16 %v261, %v260
      %v295 = vpack.c.bf16 %v263, %v262
      %v296 = vld [vmem:[%s1] sm:$0xf]
      %v297 = vld [vmem:[%s1 + $0x4] sm:$0xf]
      %v298 = vld [vmem:[%s1 + $0x8] sm:$0xf]
      %v299 = vld [vmem:[%s1 + $0xc] sm:$0xf]
      %v300 = vld [vmem:[%s1 + $0x10] sm:$0xf]
      %v301 = vld [vmem:[%s1 + $0x14] sm:$0xf]
      %v302 = vld [vmem:[%s1 + $0x18] sm:$0xf]
      %v303 = vld [vmem:[%s1 + $0x1c] sm:$0xf]
      %v304 = vld [vmem:[%s3] sm:$0xff]
      %v305 = vld [vmem:[%s3 + $0x8] sm:$0xff]
      %v306 = vld [vmem:[%s3 + $0x10] sm:$0xff]
      %v307 = vld [vmem:[%s3 + $0x18] sm:$0xff]
      %v308 = vld [vmem:[%s3 + $0x20] sm:$0xff]
      %v309 = vld [vmem:[%s3 + $0x28] sm:$0xff]
      %v310 = vld [vmem:[%s3 + $0x30] sm:$0xff]
      %v311 = vld [vmem:[%s3 + $0x38] sm:$0xff]
      %313 = vset.pattern.permute.xlu0 0
      %314 = vperm.xlu0 %313, %v304
      %v315 = vpop.permute.xlu0 %314
      %318 = vset.pattern.permute.xlu0 0
      %319 = vperm.xlu0 %318, %v305
      %v320 = vpop.permute.xlu0 %319
      %323 = vset.pattern.permute.xlu0 0
      %324 = vperm.xlu0 %323, %v306
      %v325 = vpop.permute.xlu0 %324
      %328 = vset.pattern.permute.xlu0 0
      %329 = vperm.xlu0 %328, %v307
      %v330 = vpop.permute.xlu0 %329
      %333 = vset.pattern.permute.xlu0 0
      %334 = vperm.xlu0 %333, %v308
      %v335 = vpop.permute.xlu0 %334
      %338 = vset.pattern.permute.xlu0 0
      %339 = vperm.xlu0 %338, %v309
      %v340 = vpop.permute.xlu0 %339
      %343 = vset.pattern.permute.xlu0 0
      %344 = vperm.xlu0 %343, %v310
      %v345 = vpop.permute.xlu0 %344
      %348 = vset.pattern.permute.xlu0 0
      %349 = vperm.xlu0 %348, %v311
      %v350 = vpop.permute.xlu0 %349
      %v360 = vunpack.c.l.b16 %v296
      %v361 = vunpack.c.l.b16 %v297
      %v362 = vunpack.c.l.b16 %v298
      %v363 = vunpack.c.l.b16 %v299
      %v364 = vunpack.c.l.b16 %v300
      %v365 = vunpack.c.l.b16 %v301
      %v366 = vunpack.c.l.b16 %v302
      %v367 = vunpack.c.l.b16 %v303
      %v368 = vpack.c.b16 %v361, %v360
      %v369 = vpack.c.b16 %v363, %v362
      %v370 = vpack.c.b16 %v365, %v364
      %v371 = vpack.c.b16 %v367, %v366
      %vm372 = vcmask 261120
      %v374 = vsel %vm372, %v368, 0
      %v377 = vsel %vm372, %v369, 0
      %v380 = vsel %vm372, %v370, 0
      %v383 = vsel %vm372, %v371, 0
      %v386 = vsel %vm372, %v264, 0
      %v389 = vsel %vm372, %v265, 0
      %v392 = vsel %vm372, %v266, 0
      %v395 = vsel %vm372, %v267, 0
      %v398 = vsel %vm372, %v268, 0
      %v401 = vsel %vm372, %v269, 0
      %v404 = vsel %vm372, %v270, 0
      %v407 = vsel %vm372, %v271, 0
      %v410 = vsel %vm372, %v272, 0
      %v413 = vsel %vm372, %v273, 0
      %v416 = vsel %vm372, %v274, 0
      %v419 = vsel %vm372, %v275, 0
      %v422 = vsel %vm372, %v276, 0
      %v425 = vsel %vm372, %v277, 0
      %v428 = vsel %vm372, %v278, 0
      %v431 = vsel %vm372, %v279, 0
      %v434 = vsel %vm372, %v280, 0
      %v437 = vsel %vm372, %v281, 0
      %v440 = vsel %vm372, %v282, 0
      %v443 = vsel %vm372, %v283, 0
      %v446 = vsel %vm372, %v284, 0
      %v449 = vsel %vm372, %v285, 0
      %v452 = vsel %vm372, %v286, 0
      %v455 = vsel %vm372, %v287, 0
      %v458 = vsel %vm372, %v288, 0
      %v461 = vsel %vm372, %v289, 0
      %v464 = vsel %vm372, %v290, 0
      %v467 = vsel %vm372, %v291, 0
      %v470 = vsel %vm372, %v292, 0
      %v473 = vsel %vm372, %v293, 0
      %v476 = vsel %vm372, %v294, 0
      %v479 = vsel %vm372, %v295, 0
      %481 = vmatpush.bf16.xpose.msra.mxu0 %v407
      %482 = vmatpush.bf16.xpose.msra.mxu0 %v404
      %483 = vmatpush.bf16.xpose.msra.mxu0 %v401
      %484 = vmatpush.bf16.xpose.msra.mxu0 %v398
      %485 = vmatpush.bf16.xpose.msra.mxu0 %v395
      %486 = vmatpush.bf16.xpose.msra.mxu0 %v392
      %487 = vmatpush.bf16.xpose.msra.mxu0 %v389
      %488 = vmatpush.bf16.xpose.msra.mxu0 %v386
      %489 = vmatmul.bf16.gmra.mxu0 %v374
      %v490 = vpop.f32.mrf.mxu0
      %v491 = vadd.f32 %v315, %v490
      %v492 = vpop.f32.mrf.mxu0
      %v493 = vadd.f32 %v320, %v492
      %494 = vmatmul.bf16.gmra.mxu0 %v377
      %v495 = vpop.f32.mrf.mxu0
      %v496 = vadd.f32 %v325, %v495
      %v497 = vpop.f32.mrf.mxu0
      %v498 = vadd.f32 %v330, %v497
      %499 = vmatmul.bf16.gmra.mxu0 %v380
      %v500 = vpop.f32.mrf.mxu0
      %v501 = vadd.f32 %v335, %v500
      %v502 = vpop.f32.mrf.mxu0
      %v503 = vadd.f32 %v340, %v502
      %504 = vmatmul.bf16.gmra.mxu0 %v383
      %v505 = vpop.f32.mrf.mxu0
      %v506 = vadd.f32 %v345, %v505
      %v507 = vpop.f32.mrf.mxu0
      %v508 = vadd.f32 %v350, %v507
      %509 = vdwg.mxu0
      %510 = vmatpush.bf16.xpose.msra.mxu0 %v431
      %511 = vmatpush.bf16.xpose.msra.mxu0 %v428
      %512 = vmatpush.bf16.xpose.msra.mxu0 %v425
      %513 = vmatpush.bf16.xpose.msra.mxu0 %v422
      %514 = vmatpush.bf16.xpose.msra.mxu0 %v419
      %515 = vmatpush.bf16.xpose.msra.mxu0 %v416
      %516 = vmatpush.bf16.xpose.msra.mxu0 %v413
      %517 = vmatpush.bf16.xpose.msra.mxu0 %v410
      %518 = vmatmul.bf16.gmra.mxu0 %v374
      %v519 = vpop.f32.mrf.mxu0
      %v520 = vadd.f32 %v315, %v519
      %v521 = vpop.f32.mrf.mxu0
      %v522 = vadd.f32 %v320, %v521
      %523 = vmatmul.bf16.gmra.mxu0 %v377
      %v524 = vpop.f32.mrf.mxu0
      %v525 = vadd.f32 %v325, %v524
      %v526 = vpop.f32.mrf.mxu0
      %v527 = vadd.f32 %v330, %v526
      %528 = vmatmul.bf16.gmra.mxu0 %v380
      %v529 = vpop.f32.mrf.mxu0
      %v530 = vadd.f32 %v335, %v529
      %v531 = vpop.f32.mrf.mxu0
      %v532 = vadd.f32 %v340, %v531
      %533 = vmatmul.bf16.gmra.mxu0 %v383
      %v534 = vpop.f32.mrf.mxu0
      %v535 = vadd.f32 %v345, %v534
      %v536 = vpop.f32.mrf.mxu0
      %v537 = vadd.f32 %v350, %v536
      %538 = vdwg.mxu0
      %539 = vmatpush.bf16.xpose.msra.mxu0 %v455
      %540 = vmatpush.bf16.xpose.msra.mxu0 %v452
      %541 = vmatpush.bf16.xpose.msra.mxu0 %v449
      %542 = vmatpush.bf16.xpose.msra.mxu0 %v446
      %543 = vmatpush.bf16.xpose.msra.mxu0 %v443
      %544 = vmatpush.bf16.xpose.msra.mxu0 %v440
      %545 = vmatpush.bf16.xpose.msra.mxu0 %v437
      %546 = vmatpush.bf16.xpose.msra.mxu0 %v434
      %547 = vmatmul.bf16.gmra.mxu0 %v374
      %v548 = vpop.f32.mrf.mxu0
      %v549 = vadd.f32 %v315, %v548
      %v550 = vpop.f32.mrf.mxu0
      %v551 = vadd.f32 %v320, %v550
      %552 = vmatmul.bf16.gmra.mxu0 %v377
      %v553 = vpop.f32.mrf.mxu0
      %v554 = vadd.f32 %v325, %v553
      %v555 = vpop.f32.mrf.mxu0
      %v556 = vadd.f32 %v330, %v555
      %557 = vmatmul.bf16.gmra.mxu0 %v380
      %v558 = vpop.f32.mrf.mxu0
      %v559 = vadd.f32 %v335, %v558
      %v560 = vpop.f32.mrf.mxu0
      %v561 = vadd.f32 %v340, %v560
      %562 = vmatmul.bf16.gmra.mxu0 %v383
      %v563 = vpop.f32.mrf.mxu0
      %v564 = vadd.f32 %v345, %v563
      %v565 = vpop.f32.mrf.mxu0
      %v566 = vadd.f32 %v350, %v565
      %567 = vdwg.mxu0
      %568 = vmatpush.bf16.xpose.msra.mxu0 %v479
      %569 = vmatpush.bf16.xpose.msra.mxu0 %v476
      %570 = vmatpush.bf16.xpose.msra.mxu0 %v473
      %571 = vmatpush.bf16.xpose.msra.mxu0 %v470
      %572 = vmatpush.bf16.xpose.msra.mxu0 %v467
      %573 = vmatpush.bf16.xpose.msra.mxu0 %v464
      %574 = vmatpush.bf16.xpose.msra.mxu0 %v461
      %575 = vmatpush.bf16.xpose.msra.mxu0 %v458
      %576 = vmatmul.bf16.gmra.mxu0 %v374
      %v577 = vpop.f32.mrf.mxu0
      %v578 = vadd.f32 %v315, %v577
      %v579 = vpop.f32.mrf.mxu0
      %v580 = vadd.f32 %v320, %v579
      %581 = vmatmul.bf16.gmra.mxu0 %v377
      %v582 = vpop.f32.mrf.mxu0
      %v583 = vadd.f32 %v325, %v582
      %v584 = vpop.f32.mrf.mxu0
      %v585 = vadd.f32 %v330, %v584
      %586 = vmatmul.bf16.gmra.mxu0 %v380
      %v587 = vpop.f32.mrf.mxu0
      %v588 = vadd.f32 %v335, %v587
      %v589 = vpop.f32.mrf.mxu0
      %v590 = vadd.f32 %v340, %v589
      %591 = vmatmul.bf16.gmra.mxu0 %v383
      %v592 = vpop.f32.mrf.mxu0
      %v593 = vadd.f32 %v345, %v592
      %v594 = vpop.f32.mrf.mxu0
      %v595 = vadd.f32 %v350, %v594
      %596 = vdwg.mxu0
      %vm597 = vcmp.gt.f32.partialorder %v491, 0.0
      %vm598 = vcmp.gt.f32.partialorder %v520, 0.0
      %vm599 = vcmp.gt.f32.partialorder %v549, 0.0
      %vm600 = vcmp.gt.f32.partialorder %v578, 0.0
      %vm601 = vcmp.gt.f32.partialorder %v493, 0.0
      %vm602 = vcmp.gt.f32.partialorder %v522, 0.0
      %vm603 = vcmp.gt.f32.partialorder %v551, 0.0
      %vm604 = vcmp.gt.f32.partialorder %v580, 0.0
      %vm605 = vcmp.gt.f32.partialorder %v496, 0.0
      %vm606 = vcmp.gt.f32.partialorder %v525, 0.0
      %vm607 = vcmp.gt.f32.partialorder %v554, 0.0
      %vm608 = vcmp.gt.f32.partialorder %v583, 0.0
      %vm609 = vcmp.gt.f32.partialorder %v498, 0.0
      %vm610 = vcmp.gt.f32.partialorder %v527, 0.0
      %vm611 = vcmp.gt.f32.partialorder %v556, 0.0
      %vm612 = vcmp.gt.f32.partialorder %v585, 0.0
      %vm613 = vcmp.gt.f32.partialorder %v501, 0.0
      %vm614 = vcmp.gt.f32.partialorder %v530, 0.0
      %vm615 = vcmp.gt.f32.partialorder %v559, 0.0
      %vm616 = vcmp.gt.f32.partialorder %v588, 0.0
      %vm617 = vcmp.gt.f32.partialorder %v503, 0.0
      %vm618 = vcmp.gt.f32.partialorder %v532, 0.0
      %vm619 = vcmp.gt.f32.partialorder %v561, 0.0
      %vm620 = vcmp.gt.f32.partialorder %v590, 0.0
      %vm621 = vcmp.gt.f32.partialorder %v506, 0.0
      %vm622 = vcmp.gt.f32.partialorder %v535, 0.0
      %vm623 = vcmp.gt.f32.partialorder %v564, 0.0
      %vm624 = vcmp.gt.f32.partialorder %v593, 0.0
      %vm625 = vcmp.gt.f32.partialorder %v508, 0.0
      %vm626 = vcmp.gt.f32.partialorder %v537, 0.0
      %vm627 = vcmp.gt.f32.partialorder %v566, 0.0
      %vm628 = vcmp.gt.f32.partialorder %v595, 0.0
      %v629 = vmul.f32 %v491, 0.01
      %v630 = vmul.f32 %v520, 0.01
      %v631 = vmul.f32 %v549, 0.01
      %v632 = vmul.f32 %v578, 0.01
      %v633 = vmul.f32 %v493, 0.01
      %v634 = vmul.f32 %v522, 0.01
      %v635 = vmul.f32 %v551, 0.01
      %v636 = vmul.f32 %v580, 0.01
      %v637 = vmul.f32 %v496, 0.01
      %v638 = vmul.f32 %v525, 0.01
      %v639 = vmul.f32 %v554, 0.01
      %v640 = vmul.f32 %v583, 0.01
      %v641 = vmul.f32 %v498, 0.01
      %v642 = vmul.f32 %v527, 0.01
      %v643 = vmul.f32 %v556, 0.01
      %v644 = vmul.f32 %v585, 0.01
      %v645 = vmul.f32 %v501, 0.01
      %v646 = vmul.f32 %v530, 0.01
      %v647 = vmul.f32 %v559, 0.01
      %v648 = vmul.f32 %v588, 0.01
      %v649 = vmul.f32 %v503, 0.01
      %v650 = vmul.f32 %v532, 0.01
      %v651 = vmul.f32 %v561, 0.01
      %v652 = vmul.f32 %v590, 0.01
      %v653 = vmul.f32 %v506, 0.01
      %v654 = vmul.f32 %v535, 0.01
      %v655 = vmul.f32 %v564, 0.01
      %v656 = vmul.f32 %v593, 0.01
      %v657 = vmul.f32 %v508, 0.01
      %v658 = vmul.f32 %v537, 0.01
      %v659 = vmul.f32 %v566, 0.01
      %v660 = vmul.f32 %v595, 0.01
      %v661 = vsel %vm597, %v491, %v629
      %v662 = vsel %vm598, %v520, %v630
      %v663 = vsel %vm599, %v549, %v631
      %v664 = vsel %vm600, %v578, %v632
      %v665 = vsel %vm601, %v493, %v633
      %v666 = vsel %vm602, %v522, %v634
      %v667 = vsel %vm603, %v551, %v635
      %v668 = vsel %vm604, %v580, %v636
      %v669 = vsel %vm605, %v496, %v637
      %v670 = vsel %vm606, %v525, %v638
      %v671 = vsel %vm607, %v554, %v639
      %v672 = vsel %vm608, %v583, %v640
      %v673 = vsel %vm609, %v498, %v641
      %v674 = vsel %vm610, %v527, %v642
      %v675 = vsel %vm611, %v556, %v643
      %v676 = vsel %vm612, %v585, %v644
      %v677 = vsel %vm613, %v501, %v645
      %v678 = vsel %vm614, %v530, %v646
      %v679 = vsel %vm615, %v559, %v647
      %v680 = vsel %vm616, %v588, %v648
      %v681 = vsel %vm617, %v503, %v649
      %v682 = vsel %vm618, %v532, %v650
      %v683 = vsel %vm619, %v561, %v651
      %v684 = vsel %vm620, %v590, %v652
      %v685 = vsel %vm621, %v506, %v653
      %v686 = vsel %vm622, %v535, %v654
      %v687 = vsel %vm623, %v564, %v655
      %v688 = vsel %vm624, %v593, %v656
      %v689 = vsel %vm625, %v508, %v657
      %v690 = vsel %vm626, %v537, %v658
      %v691 = vsel %vm627, %v566, %v659
      %v692 = vsel %vm628, %v595, %v660
      %v693 = vld [vmem:[%s2] sm:$0xf]
      %v694 = vld [vmem:[%s2 + $0x4] sm:$0xf]
      %v695 = vld [vmem:[%s2 + $0x8] sm:$0xf]
      %v696 = vld [vmem:[%s2 + $0xc] sm:$0xf]
      %v697 = vpack.c.bf16 %v665, %v661
      %v698 = vpack.c.bf16 %v666, %v662
      %v699 = vpack.c.bf16 %v667, %v663
      %v700 = vpack.c.bf16 %v668, %v664
      %v701 = vpack.c.bf16 %v673, %v669
      %v702 = vpack.c.bf16 %v674, %v670
      %v703 = vpack.c.bf16 %v675, %v671
      %v704 = vpack.c.bf16 %v676, %v672
      %v705 = vpack.c.bf16 %v681, %v677
      %v706 = vpack.c.bf16 %v682, %v678
      %v707 = vpack.c.bf16 %v683, %v679
      %v708 = vpack.c.bf16 %v684, %v680
      %v709 = vpack.c.bf16 %v689, %v685
      %v710 = vpack.c.bf16 %v690, %v686
      %v711 = vpack.c.bf16 %v691, %v687
      %v712 = vpack.c.bf16 %v692, %v688
      %v713 = vld [vmem:[%s3 + $0x40] sm:$0xff]
      %v714 = vld [vmem:[%s3 + $0x48] sm:$0xff]
      %v715 = vld [vmem:[%s3 + $0x50] sm:$0xff]
      %v716 = vld [vmem:[%s3 + $0x58] sm:$0xff]
      %718 = vset.pattern.permute.xlu0 0
      %719 = vperm.xlu0 %718, %v713
      %v720 = vpop.permute.xlu0 %719
      %723 = vset.pattern.permute.xlu0 0
      %724 = vperm.xlu0 %723, %v714
      %v725 = vpop.permute.xlu0 %724
      %728 = vset.pattern.permute.xlu0 0
      %729 = vperm.xlu0 %728, %v715
      %v730 = vpop.permute.xlu0 %729
      %733 = vset.pattern.permute.xlu0 0
      %734 = vperm.xlu0 %733, %v716
      %v735 = vpop.permute.xlu0 %734
      %v741 = vunpack.c.l.b16 %v693
      %v742 = vunpack.c.l.b16 %v694
      %v743 = vunpack.c.l.b16 %v695
      %v744 = vunpack.c.l.b16 %v696
      %v745 = vpack.c.b16 %v742, %v741
      %v746 = vpack.c.b16 %v744, %v743
      %vm747 = vcmask 523264
      %v749 = vsel %vm747, %v745, 0
      %v752 = vsel %vm747, %v746, 0
      %754 = vmatpush.bf16.msra.mxu0 0
      %755 = vmatpush.bf16.msra.mxu0 0
      %756 = vmatpush.bf16.msra.mxu0 0
      %757 = vmatpush.bf16.msra.mxu0 0
      %758 = vmatpush.bf16.msra.mxu0 %v709
      %759 = vmatpush.bf16.msra.mxu0 %v705
      %760 = vmatpush.bf16.msra.mxu0 %v701
      %761 = vmatpush.bf16.msra.mxu0 %v697
      %762 = vmatmul.bf16.gmra.mxu0 %v749
      %v763 = vpop.f32.mrf.mxu0
      %v764 = vadd.f32 %v720, %v763
      %v765 = vpop.f32.mrf.mxu0
      %v766 = vadd.f32 %v725, %v765
      %767 = vmatmul.bf16.gmra.mxu0 %v752
      %v768 = vpop.f32.mrf.mxu0
      %v769 = vadd.f32 %v730, %v768
      %v770 = vpop.f32.mrf.mxu0
      %v771 = vadd.f32 %v735, %v770
      %772 = vdwg.mxu0
      %773 = vmatpush.bf16.msra.mxu0 0
      %774 = vmatpush.bf16.msra.mxu0 0
      %775 = vmatpush.bf16.msra.mxu0 0
      %776 = vmatpush.bf16.msra.mxu0 0
      %777 = vmatpush.bf16.msra.mxu0 %v710
      %778 = vmatpush.bf16.msra.mxu0 %v706
      %779 = vmatpush.bf16.msra.mxu0 %v702
      %780 = vmatpush.bf16.msra.mxu0 %v698
      %781 = vmatmul.bf16.gmra.mxu0 %v749
      %v782 = vpop.f32.mrf.mxu0
      %v783 = vadd.f32 %v720, %v782
      %v784 = vpop.f32.mrf.mxu0
      %v785 = vadd.f32 %v725, %v784
      %786 = vmatmul.bf16.gmra.mxu0 %v752
      %v787 = vpop.f32.mrf.mxu0
      %v788 = vadd.f32 %v730, %v787
      %v789 = vpop.f32.mrf.mxu0
      %v790 = vadd.f32 %v735, %v789
      %791 = vdwg.mxu0
      %792 = vmatpush.bf16.msra.mxu0 0
      %793 = vmatpush.bf16.msra.mxu0 0
      %794 = vmatpush.bf16.msra.mxu0 0
      %795 = vmatpush.bf16.msra.mxu0 0
      %796 = vmatpush.bf16.msra.mxu0 %v711
      %797 = vmatpush.bf16.msra.mxu0 %v707
      %798 = vmatpush.bf16.msra.mxu0 %v703
      %799 = vmatpush.bf16.msra.mxu0 %v699
      %800 = vmatmul.bf16.gmra.mxu0 %v749
      %v801 = vpop.f32.mrf.mxu0
      %v802 = vadd.f32 %v720, %v801
      %v803 = vpop.f32.mrf.mxu0
      %v804 = vadd.f32 %v725, %v803
      %805 = vmatmul.bf16.gmra.mxu0 %v752
      %v806 = vpop.f32.mrf.mxu0
      %v807 = vadd.f32 %v730, %v806
      %v808 = vpop.f32.mrf.mxu0
      %v809 = vadd.f32 %v735, %v808
      %810 = vdwg.mxu0
      %811 = vmatpush.bf16.msra.mxu0 0
      %812 = vmatpush.bf16.msra.mxu0 0
      %813 = vmatpush.bf16.msra.mxu0 0
      %814 = vmatpush.bf16.msra.mxu0 0
      %815 = vmatpush.bf16.msra.mxu0 %v712
      %816 = vmatpush.bf16.msra.mxu0 %v708
      %817 = vmatpush.bf16.msra.mxu0 %v704
      %818 = vmatpush.bf16.msra.mxu0 %v700
      %819 = vmatmul.bf16.gmra.mxu0 %v749
      %v820 = vpop.f32.mrf.mxu0
      %v821 = vadd.f32 %v720, %v820
      %v822 = vpop.f32.mrf.mxu0
      %v823 = vadd.f32 %v725, %v822
      %824 = vmatmul.bf16.gmra.mxu0 %v752
      %v825 = vpop.f32.mrf.mxu0
      %v826 = vadd.f32 %v730, %v825
      %v827 = vpop.f32.mrf.mxu0
      %v828 = vadd.f32 %v735, %v827
      %829 = vdwg.mxu0
      %vm830 = vcmp.gt.f32.partialorder %v764, 0.0
      %vm831 = vcmp.gt.f32.partialorder %v783, 0.0
      %vm832 = vcmp.gt.f32.partialorder %v802, 0.0
      %vm833 = vcmp.gt.f32.partialorder %v821, 0.0
      %vm834 = vcmp.gt.f32.partialorder %v766, 0.0
      %vm835 = vcmp.gt.f32.partialorder %v785, 0.0
      %vm836 = vcmp.gt.f32.partialorder %v804, 0.0
      %vm837 = vcmp.gt.f32.partialorder %v823, 0.0
      %vm838 = vcmp.gt.f32.partialorder %v769, 0.0
      %vm839 = vcmp.gt.f32.partialorder %v788, 0.0
      %vm840 = vcmp.gt.f32.partialorder %v807, 0.0
      %vm841 = vcmp.gt.f32.partialorder %v826, 0.0
      %vm842 = vcmp.gt.f32.partialorder %v771, 0.0
      %vm843 = vcmp.gt.f32.partialorder %v790, 0.0
      %vm844 = vcmp.gt.f32.partialorder %v809, 0.0
      %vm845 = vcmp.gt.f32.partialorder %v828, 0.0
      %v846 = vmul.f32 %v764, 0.01
      %v847 = vmul.f32 %v783, 0.01
      %v848 = vmul.f32 %v802, 0.01
      %v849 = vmul.f32 %v821, 0.01
      %v850 = vmul.f32 %v766, 0.01
      %v851 = vmul.f32 %v785, 0.01
      %v852 = vmul.f32 %v804, 0.01
      %v853 = vmul.f32 %v823, 0.01
      %v854 = vmul.f32 %v769, 0.01
      %v855 = vmul.f32 %v788, 0.01
      %v856 = vmul.f32 %v807, 0.01
      %v857 = vmul.f32 %v826, 0.01
      %v858 = vmul.f32 %v771, 0.01
      %v859 = vmul.f32 %v790, 0.01
      %v860 = vmul.f32 %v809, 0.01
      %v861 = vmul.f32 %v828, 0.01
      %v862 = vsel %vm830, %v764, %v846
      %v863 = vsel %vm831, %v783, %v847
      %v864 = vsel %vm832, %v802, %v848
      %v865 = vsel %vm833, %v821, %v849
      %v866 = vsel %vm834, %v766, %v850
      %v867 = vsel %vm835, %v785, %v851
      %v868 = vsel %vm836, %v804, %v852
      %v869 = vsel %vm837, %v823, %v853
      %v870 = vsel %vm838, %v769, %v854
      %v871 = vsel %vm839, %v788, %v855
      %v872 = vsel %vm840, %v807, %v856
      %v873 = vsel %vm841, %v826, %v857
      %v874 = vsel %vm842, %v771, %v858
      %v875 = vsel %vm843, %v790, %v859
      %v876 = vsel %vm844, %v809, %v860
      %v877 = vsel %vm845, %v828, %v861
      %v878 = vld [vmem:[%s3 + $0x60] sm:$0xff]
      %v879 = vld [vmem:[%s3 + $0x68] sm:$0xff]
      %v880 = vld [vmem:[%s3 + $0x70] sm:$0xff]
      %v881 = vld [vmem:[%s3 + $0x78] sm:$0xff]
      %883 = vset.pattern.permute.xlu0 0
      %884 = vperm.xlu0 %883, %v878
      %v885 = vpop.permute.xlu0 %884
      %888 = vset.pattern.permute.xlu0 0
      %889 = vperm.xlu0 %888, %v879
      %v890 = vpop.permute.xlu0 %889
      %893 = vset.pattern.permute.xlu0 0
      %894 = vperm.xlu0 %893, %v880
      %v895 = vpop.permute.xlu0 %894
      %898 = vset.pattern.permute.xlu0 0
      %899 = vperm.xlu0 %898, %v881
      %v900 = vpop.permute.xlu0 %899
      %v902 = vmul.f32 %v862, %v885
      %v903 = vmul.f32 %v863, %v885
      %v904 = vmul.f32 %v864, %v885
      %v905 = vmul.f32 %v865, %v885
      %v906 = vmul.f32 %v866, %v890
      %v907 = vmul.f32 %v867, %v890
      %v908 = vmul.f32 %v868, %v890
      %v909 = vmul.f32 %v869, %v890
      %v910 = vmul.f32 %v870, %v895
      %v911 = vmul.f32 %v871, %v895
      %v912 = vmul.f32 %v872, %v895
      %v913 = vmul.f32 %v873, %v895
      %v914 = vmul.f32 %v874, %v900
      %v915 = vmul.f32 %v875, %v900
      %v916 = vmul.f32 %v876, %v900
      %v917 = vmul.f32 %v877, %v900
      %v918 = vadd.f32 %v902, %v906
      %v919 = vadd.f32 %v918, %v910
      %v920 = vadd.f32 %v919, %v914
      %v921 = vrot.slane %v920, 4
      %v922 = vadd.f32 %v920, %v921
      %v923 = vrot.slane %v922, 2
      %v924 = vadd.f32 %v922, %v923
      %v925 = vrot.slane %v924, 1
      %v926 = vadd.f32 %v924, %v925
      %v927 = vadd.f32 %v903, %v907
      %v928 = vadd.f32 %v927, %v911
      %v929 = vadd.f32 %v928, %v915
      %v930 = vrot.slane %v929, 4
      %v931 = vadd.f32 %v929, %v930
      %v932 = vrot.slane %v931, 2
      %v933 = vadd.f32 %v931, %v932
      %v934 = vrot.slane %v933, 1
      %v935 = vadd.f32 %v933, %v934
      %v936 = vadd.f32 %v904, %v908
      %v937 = vadd.f32 %v936, %v912
      %v938 = vadd.f32 %v937, %v916
      %v939 = vrot.slane %v938, 4
      %v940 = vadd.f32 %v938, %v939
      %v941 = vrot.slane %v940, 2
      %v942 = vadd.f32 %v940, %v941
      %v943 = vrot.slane %v942, 1
      %v944 = vadd.f32 %v942, %v943
      %v945 = vadd.f32 %v905, %v909
      %v946 = vadd.f32 %v945, %v913
      %v947 = vadd.f32 %v946, %v917
      %v948 = vrot.slane %v947, 4
      %v949 = vadd.f32 %v947, %v948
      %v950 = vrot.slane %v949, 2
      %v951 = vadd.f32 %v949, %v950
      %v952 = vrot.slane %v951, 1
      %v953 = vadd.f32 %v951, %v952
      %v954 = vld [vmem:[%s3 + $0x80] sm:$0x1]
      %956 = vset.pattern.permute.xlu0 0
      %957 = vperm.xlu0 %956, %v954
      %v958 = vpop.permute.xlu0 %957
      %v960 = vadd.f32 %v926, %v958
      %v961 = vadd.f32 %v935, %v958
      %v962 = vadd.f32 %v944, %v958
      %v963 = vadd.f32 %v953, %v958
      %v968 = vrot.slane %v961, 7
      %v969 = vrot.slane %v962, 6
      %v970 = vrot.slane %v963, 5
      %vm971 = vcmask 1040384
      %v972 = vsel %vm971, %v960, %v968
      %vm973 = vcmask 1042434
      %v974 = vsel %vm973, %v969, %v970
      %vm975 = vcmask 1041408
      %v976 = vsel %vm975, %v972, %v974
      %v978 = vlaneseq
      %vm979 = vcmp.ge.s32.totalorder %v978, 0
      %vm980 = vcmp.lt.s32.totalorder %v978, 512
      %vm981 = vmand %vm979, %vm980
      %982 = vst.msk [vmem:[%s197] sm:$0xf] %vm981, %v976
      %s983 = smul.u32 4, %s15
      %p984 = scmp.lt.s32.totalorder %s983, 7
      %s985 = scalar_select %p984, %s983, 7
      %s986 = scalar_lea.vmem %s4, %s985
      // Predicated region
      $region37: #{local_estimator_forward.1} parent=35 // pred_check
        %p987 = pneg %p122
      $region38: #{local_estimator_forward.1} parent=35 // pred_check_branch
        %989 = sbr.rel (%p987) target = $region40
      $region39: #{local_estimator_forward.1} parent=35 // pred_region
        %s990 = smul.u32 4, %s15
      $region40: #{local_estimator_forward.1} parent=35 // pred_fallthru
        _
    $region36: #{local_estimator_forward.1} parent=5 // pred_fallthru
      _
    %p991 = scmp.le.s32.totalorder 2, %s10
    // Predicated region
    $region41: #{local_estimator_forward.1} parent=5 // pred_check
      %p992 = pneg %p991
    $region42: #{local_estimator_forward.1} parent=5 // pred_check_branch
      %994 = sbr.rel (%p992) target = $region44
    $region43: #{local_estimator_forward.1} parent=5 // pred_region
      %s995 = ssub.s32 %s10, 2
      // Predicated region
      $region45: #{local_estimator_forward.1} parent=43 // pred_check
        %p996 = pneg %p128
      $region46: #{local_estimator_forward.1} parent=43 // pred_check_branch
        %998 = sbr.rel (%p996) target = $region48
      $region47: #{local_estimator_forward.1} parent=43 // pred_region
        %s999 = smul.u32 4, %s16
        %p1000 = scmp.lt.s32.totalorder %s999, 7
        %s1001 = scalar_select %p1000, %s999, 7
        %s1002 = scalar_lea.vmem %s4, %s1001
      $region48: #{local_estimator_forward.1} parent=43 // pred_fallthru
        _
    $region44: #{local_estimator_forward.1} parent=5 // pred_fallthru
      _
  $region6: #{local_estimator_forward.1} parent=0 // loop_footer
    %s14 = sadd.s32 1, %s10
  $region7: #{local_estimator_forward.1} parent=0 // loop_footer_branch
    %9 = sbr.rel target = $region3
  $region8: #{local_estimator_forward.1} parent=0 // loop_exit
    _

</llo_original>
